<compile_context>
chip_gen: v7x
topology: tpu7x:2x2x1
jax: 0.10.0
libtpu: 0.0.40
codegen_flags: <defaults>
</compile_context>

<pallas_src>
import numpy as np
import jax
import jax.numpy as jnp
from jax.experimental import pallas as pl
from jax.experimental.pallas import tpu as pltpu

# ---------------- Kaldi-compatible MFCC config (deterministic) ----------------
SAMPLE_FREQUENCY = 2000.0      # Hz (small synthetic config)
FRAME_LENGTH_MS  = 64.0        # -> window_size = 128 samples
FRAME_SHIFT_MS   = 32.0        # -> window_shift = 64 samples
NUM_MEL_BINS     = 23
NUM_CEPS         = 13
LOW_FREQ         = 20.0
HIGH_FREQ        = 0.0         # <=0 -> Nyquist
PREEMPHASIS      = 0.97
CEPSTRAL_LIFTER  = 22.0
REMOVE_DC_OFFSET = True
EPS = float(np.finfo(np.float32).eps)   # torchaudio _get_epsilon(float32)

WINDOW_SIZE        = int(SAMPLE_FREQUENCY * FRAME_LENGTH_MS * 0.001)   # 128
WINDOW_SHIFT       = int(SAMPLE_FREQUENCY * FRAME_SHIFT_MS * 0.001)    # 64
PADDED_WINDOW_SIZE = 1 << (WINDOW_SIZE - 1).bit_length()               # next pow2 = 128
NUM_FFT_BINS       = PADDED_WINDOW_SIZE // 2                           # 64
F                  = NUM_FFT_BINS + 1                                  # rfft bins = 65

# lane-dense padded dims
F_PAD  = 128                   # rfft bins padded to a full vreg lane width
B_PAD  = 128                   # mel bins padded
C_PAD  = 128                   # cepstra padded (output last dim)
TM_MAX = 256                   # max frames per grid step


def _round_up(a, b):
    return ((a + b - 1) // b) * b


# ---------------- deterministic parameter construction (glue) ----------------
def _mel_scale(freq):
    return 1127.0 * np.log(1.0 + freq / 700.0)


def _povey_window(window_size):
    n = np.arange(window_size, dtype=np.float64)
    hann = 0.5 - 0.5 * np.cos(2.0 * np.pi * n / (window_size - 1))     # periodic=False
    return hann ** 0.85                                                # float64


def _combined_dft_matrix():
    """(WINDOW_SIZE, 2*F_PAD) matrix folding DC-removal, pre-emphasis, Povey window and
    the real DFT of the zero-padded frame into one matmul: y = frames @ M,
    re = y[:, :F_PAD], im = y[:, F_PAD:]."""
    W = WINDOW_SIZE
    # linear preprocessing, acting on row-vector frames from the right
    T = np.eye(W)
    if REMOVE_DC_OFFSET:
        T = T @ (np.eye(W) - np.ones((W, W)) / W)                      # x - mean(x)
    pre = np.eye(W)                                                    # x[n] - c*x[n-1]
    for i in range(1, W):
        pre[i, i - 1] = -PREEMPHASIS
    pre[0, 0] = 1.0 - PREEMPHASIS                                      # replicate-left pad
    T = T @ pre.T
    T = T @ np.diag(_povey_window(W))                                  # povey window
    # real DFT of the zero-padded frame: X[k] = sum_{n<W} x[n] exp(-2j*pi*k*n/P)
    n = np.arange(W, dtype=np.float64)[:, None]
    k = np.arange(F, dtype=np.float64)[None, :]
    ang = 2.0 * np.pi * n * k / PADDED_WINDOW_SIZE
    re_mat = T @ np.cos(ang)                                           # (W, F)
    im_mat = T @ (-np.sin(ang))                                        # (W, F)
    comb = np.zeros((W, 2 * F_PAD), dtype=np.float64)
    comb[:, :F] = re_mat
    comb[:, F_PAD:F_PAD + F] = im_mat
    return comb.astype(np.float32)


def _mel_banks():
    num_fft_bins = PADDED_WINDOW_SIZE // 2
    nyquist = 0.5 * SAMPLE_FREQUENCY
    high_freq = HIGH_FREQ if HIGH_FREQ > 0.0 else HIGH_FREQ + nyquist
    fft_bin_width = SAMPLE_FREQUENCY / PADDED_WINDOW_SIZE
    mel_low = _mel_scale(LOW_FREQ)
    mel_high = _mel_scale(high_freq)
    mel_delta = (mel_high - mel_low) / (NUM_MEL_BINS + 1)
    b = np.arange(NUM_MEL_BINS, dtype=np.float64)[:, None]
    left_mel = mel_low + b * mel_delta
    center_mel = mel_low + (b + 1.0) * mel_delta
    right_mel = mel_low + (b + 2.0) * mel_delta
    mel = _mel_scale(fft_bin_width * np.arange(num_fft_bins, dtype=np.float64))[None, :]
    up = (mel - left_mel) / (center_mel - left_mel)
    down = (right_mel - mel) / (right_mel - center_mel)
    banks = np.maximum(0.0, np.minimum(up, down))            # (B, num_fft_bins)
    banks = np.pad(banks, ((0, 0), (0, 1)))                  # zero Nyquist column -> (B, F)
    return banks


def _padded_mel_matrix():
    out = np.zeros((F_PAD, B_PAD), dtype=np.float64)
    out[:F, :NUM_MEL_BINS] = _mel_banks().T                  # (F, B) into padded slab
    return out.astype(np.float32)


def _padded_dct_lifter_matrix():
    n = np.arange(NUM_MEL_BINS, dtype=np.float64)[None, :]
    k = np.arange(NUM_MEL_BINS, dtype=np.float64)[:, None]
    dct = np.cos(np.pi / NUM_MEL_BINS * (n + 0.5) * k) * np.sqrt(2.0 / NUM_MEL_BINS)
    dct[0, :] = np.sqrt(1.0 / NUM_MEL_BINS)                  # kaldi-style DC row
    dct = dct.T[:, :NUM_CEPS]                                # (B, C)
    i = np.arange(NUM_CEPS, dtype=np.float64)
    lift = 1.0 + 0.5 * CEPSTRAL_LIFTER * np.sin(np.pi * i / CEPSTRAL_LIFTER)
    out = np.zeros((B_PAD, C_PAD), dtype=np.float64)
    out[:NUM_MEL_BINS, :NUM_CEPS] = dct * lift[None, :]      # lifter folded into DCT
    return out.astype(np.float32)


# ------------------------------- Pallas kernel --------------------------------
def _mfcc_kernel(frames_ref, dft_ref, mel_ref, dct_ref, out_ref):
    x = frames_ref[...]                                                 # (TM, 128) f32
    # power spectrum |rfft(preproc(x))|^2 via one fused (128, 256) MXU matmul
    y = jnp.dot(x, dft_ref[...], preferred_element_type=jnp.float32)    # (TM, 256)
    re = y[:, :F_PAD]
    im = y[:, F_PAD:]
    power = re * re + im * im                                           # (TM, 128)
    # mel filterbank + log
    mel = jnp.dot(power, mel_ref[...], preferred_element_type=jnp.float32)   # (TM, 128)
    logmel = jnp.log(jnp.maximum(mel, EPS))
    # DCT (lifter pre-folded), lane-dense output slab
    out_ref[...] = jnp.dot(logmel, dct_ref[...], preferred_element_type=jnp.float32)


# --------------------------------- wrapper ------------------------------------
def kaldi_mfcc(x):
    """x: (num_samples,) float32 waveform -> (num_ceps, num_frames) float32."""
    waveform = x.reshape(1, -1)[0].astype(jnp.float32)        # x.unsqueeze(0); channel 0
    n = waveform.shape[0]
    if n < WINDOW_SIZE:
        raise ValueError("waveform shorter than one window (snip_edges=True -> 0 frames)")
    m = 1 + (n - WINDOW_SIZE) // WINDOW_SHIFT                 # snip_edges=True

    # framing without an XLA gather: WINDOW_SIZE == 2*WINDOW_SHIFT, so frame i is
    # shift-rows i and i+1 concatenated.
    assert WINDOW_SIZE == 2 * WINDOW_SHIFT
    rows = waveform[: (m + 1) * WINDOW_SHIFT].reshape(m + 1, WINDOW_SHIFT)
    frames = jnp.concatenate([rows[:-1], rows[1:]], axis=1)   # (m, 128)

    tm = min(TM_MAX, _round_up(m, 8))                         # frames per grid step
    m_pad = _round_up(m, tm)
    if m_pad != m:
        frames = jnp.pad(frames, ((0, m_pad - m), (0, 0)))

    dft_c = jnp.asarray(_combined_dft_matrix())               # (128, 256)
    mel_c = jnp.asarray(_padded_mel_matrix())                 # (128, 128)
    dct_c = jnp.asarray(_padded_dct_lifter_matrix())          # (128, 128)

    out = pl.pallas_call(
        _mfcc_kernel,
        out_shape=jax.ShapeDtypeStruct((m_pad, C_PAD), jnp.float32),
        grid=(m_pad // tm,),
        in_specs=[
            pl.BlockSpec((tm, WINDOW_SIZE), lambda i: (i, 0)),            # frames tile
            pl.BlockSpec((WINDOW_SIZE, 2 * F_PAD), lambda i: (0, 0)),     # fused DFT
            pl.BlockSpec((F_PAD, B_PAD), lambda i: (0, 0)),               # mel banks^T
            pl.BlockSpec((B_PAD, C_PAD), lambda i: (0, 0)),               # DCT * lifter
        ],
        out_specs=pl.BlockSpec((tm, C_PAD), lambda i: (i, 0)),
        compiler_params=pltpu.CompilerParams(dimension_semantics=("parallel",)),
    )(frames, dft_c, mel_c, dct_c)

    # padded tail frames / padded cepstral lanes sliced off BEFORE any checks
    return out[:m, :NUM_CEPS].T                               # == kaldi.mfcc(x).T


if __name__ == "__main__":
    key = jax.random.PRNGKey(0)

    # small case: 576 samples -> 8 frames (single grid step)
    num_samples = WINDOW_SIZE + 7 * WINDOW_SHIFT
    x = jax.random.normal(key, (num_samples,), dtype=jnp.float32)
    feats = jax.block_until_ready(kaldi_mfcc(x))
    assert feats.shape == (NUM_CEPS, 8), feats.shape
    assert bool(jnp.all(jnp.isfinite(feats)))

    # larger case: 1000 frames -> exercises TM=256 tiling and the 4-step parallel grid
    num_samples2 = WINDOW_SIZE + 999 * WINDOW_SHIFT
    x2 = jax.random.normal(jax.random.PRNGKey(1), (num_samples2,), dtype=jnp.float32)
    feats2 = jax.block_until_ready(kaldi_mfcc(x2))
    assert feats2.shape == (NUM_CEPS, 1000), feats2.shape
    assert bool(jnp.all(jnp.isfinite(feats2)))

    print("KERNEL_OK")
</pallas_src>

<mosaic_0001>
module attributes {stable_mosaic.version = 11 : i64} {
  func.func @_mfcc_kernel(%arg0: i32, %arg1: memref<8x128xf32, #tpu.memory_space<vmem>>, %arg2: memref<128x256xf32, #tpu.memory_space<vmem>>, %arg3: memref<128x128xf32, #tpu.memory_space<vmem>>, %arg4: memref<128x128xf32, #tpu.memory_space<vmem>>, %arg5: memref<8x128xf32, #tpu.memory_space<vmem>>) attributes {dimension_semantics = [#tpu.dimension_semantics<parallel>], iteration_bounds = array<i64: 1>, scalar_prefetch = 0 : i64, scratch_operands = 0 : i64, tpu.core_type = #tpu.core_type<tc>, window_params = [{transform_indices = @transform_0, window_bounds = array<i64: 8, 128>}, {pipeline_mode = #tpu.pipeline_mode<synchronous>, transform_indices = @transform_1, window_bounds = array<i64: 128, 256>}, {pipeline_mode = #tpu.pipeline_mode<synchronous>, transform_indices = @transform_2, window_bounds = array<i64: 128, 128>}, {pipeline_mode = #tpu.pipeline_mode<synchronous>, transform_indices = @transform_3, window_bounds = array<i64: 128, 128>}, {transform_indices = @transform_4, window_bounds = array<i64: 8, 128>}]} {
    %c0 = arith.constant 0 : index
    %c0_0 = arith.constant 0 : index
    %0 = vector.load %arg1[%c0, %c0_0] : memref<8x128xf32, #tpu.memory_space<vmem>>, vector<8x128xf32>
    %c0_1 = arith.constant 0 : index
    %c0_2 = arith.constant 0 : index
    %1 = vector.load %arg2[%c0_1, %c0_2] : memref<128x256xf32, #tpu.memory_space<vmem>>, vector<128x256xf32>
    %cst = arith.constant dense<0.000000e+00> : vector<8x256xf32>
    %2 = tpu.matmul %0, %1, %cst {dimension_numbers = #tpu.dot_dimension_numbers<[1], [0], [0], [1], [0, 0, 1, 1], [], []>} : vector<8x128xf32>, vector<128x256xf32>, vector<8x256xf32> -> vector<8x256xf32>
    %3 = vector.extract_strided_slice %2 {offsets = [0, 0], sizes = [8, 128], strides = [1, 1]} : vector<8x256xf32> to vector<8x128xf32>
    %4 = vector.extract_strided_slice %2 {offsets = [0, 128], sizes = [8, 128], strides = [1, 1]} : vector<8x256xf32> to vector<8x128xf32>
    %5 = arith.mulf %3, %3 : vector<8x128xf32>
    %6 = arith.mulf %4, %4 : vector<8x128xf32>
    %7 = arith.addf %5, %6 : vector<8x128xf32>
    %c0_3 = arith.constant 0 : index
    %c0_4 = arith.constant 0 : index
    %8 = vector.load %arg3[%c0_3, %c0_4] : memref<128x128xf32, #tpu.memory_space<vmem>>, vector<128x128xf32>
    %cst_5 = arith.constant dense<0.000000e+00> : vector<8x128xf32>
    %9 = tpu.matmul %7, %8, %cst_5 {dimension_numbers = #tpu.dot_dimension_numbers<[1], [0], [0], [1], [0, 0, 1, 1], [], []>} : vector<8x128xf32>, vector<128x128xf32>, vector<8x128xf32> -> vector<8x128xf32>
    %cst_6 = arith.constant 1.1920929E-7 : f32
    %10 = vector.broadcast %cst_6 : f32 to vector<8x128xf32>
    %11 = arith.maximumf %9, %10 : vector<8x128xf32>
    %12 = math.log %11 : vector<8x128xf32>
    %c0_7 = arith.constant 0 : index
    %c0_8 = arith.constant 0 : index
    %13 = vector.load %arg4[%c0_7, %c0_8] : memref<128x128xf32, #tpu.memory_space<vmem>>, vector<128x128xf32>
    %cst_9 = arith.constant dense<0.000000e+00> : vector<8x128xf32>
    %14 = tpu.matmul %12, %13, %cst_9 {dimension_numbers = #tpu.dot_dimension_numbers<[1], [0], [0], [1], [0, 0, 1, 1], [], []>} : vector<8x128xf32>, vector<128x128xf32>, vector<8x128xf32> -> vector<8x128xf32>
    %c0_10 = arith.constant 0 : index
    %c0_11 = arith.constant 0 : index
    %15 = vector.load %arg5[%c0_10, %c0_11] : memref<8x128xf32, #tpu.memory_space<vmem>>, vector<8x128xf32>
    tpu.vector_store %arg5[%c0_10, %c0_11], %14 {strides = array<i32>} : memref<8x128xf32, #tpu.memory_space<vmem>>, vector<8x128xf32>,
    return
  }
  func.func @transform_0(%arg0: i32) -> (i32, i32) {
    %c0_i32 = arith.constant 0 : i32
    %c0_i32_0 = arith.constant 0 : i32
    return %arg0, %c0_i32 : i32, i32
  }
  func.func @transform_1(%arg0: i32) -> (i32, i32) {
    %c0_i32 = arith.constant 0 : i32
    %c0_i32_0 = arith.constant 0 : i32
    %c0_i32_1 = arith.constant 0 : i32
    return %c0_i32, %c0_i32_0 : i32, i32
  }
  func.func @transform_2(%arg0: i32) -> (i32, i32) {
    %c0_i32 = arith.constant 0 : i32
    %c0_i32_0 = arith.constant 0 : i32
    %c0_i32_1 = arith.constant 0 : i32
    return %c0_i32, %c0_i32_0 : i32, i32
  }
  func.func @transform_3(%arg0: i32) -> (i32, i32) {
    %c0_i32 = arith.constant 0 : i32
    %c0_i32_0 = arith.constant 0 : i32
    %c0_i32_1 = arith.constant 0 : i32
    return %c0_i32, %c0_i32_0 : i32, i32
  }
  func.func @transform_4(%arg0: i32) -> (i32, i32) {
    %c0_i32 = arith.constant 0 : i32
    %c0_i32_0 = arith.constant 0 : i32
    return %arg0, %c0_i32 : i32, i32
  }
}

</mosaic_0001>

<llo_original>
// kernel: tpu_custom_call.1
$region0: #{tpu_custom_call.1}
  #allocation0 [shape = 'u32[]', space=smem, size = 0x4, offset = 0x4, fixed_abs, tag = 'smem constant byte address 0x4 - core index']
  #allocation1 [shape = 'u32[144,128]{1,0:T(1,128)}', space=vmem, size = 0x12000, scoped, tag = 'internal scratch']
  %s0 = inlined_call_operand.hbm [shape: f32[8,128], index: 0, kind: input, shape index: {}]
  %s1 = inlined_call_operand.hbm [shape: f32[128,256], index: 1, kind: input, shape index: {}]
  %s2 = inlined_call_operand.hbm [shape: f32[128,128], index: 2, kind: input, shape index: {}]
  %s3 = inlined_call_operand.hbm [shape: f32[128,128], index: 3, kind: input, shape index: {}]
  %s4 = inlined_call_operand.hbm [shape: f32[8,128], index: 4, kind: output, shape index: {}]
  %s5 = sld [smem:[#allocation0]]
  $region42: #{tpu_custom_call.1} parent=0
    _
  %s7 = ssub.s32 1, %s5
  %s8 = scalar_select 0, %s7, %s5
  $region1: #{tpu_custom_call.1} parent=0
    #allocation2 [shape = 'u8[4096]{0}', space=vmem, size = 0x1000, scoped, tag = 'input window, operand 0, single buffered']
    #allocation3 [shape = 's32[1]{0}', space=sflag, size = 0x4, scoped, tag = 'scoped memory for tpu_custom_call.1']
    #allocation4 [shape = 's32[1]{0}', space=sflag, size = 0x4, scoped, tag = 'scoped memory for tpu_custom_call.1']
    #allocation5 [shape = 'u8[131072]{0}', space=vmem, size = 0x20000, scoped, tag = 'input window, operand 1, single buffered']
    #allocation6 [shape = 's32[1]{0}', space=sflag, size = 0x4, scoped, tag = 'scoped memory for tpu_custom_call.1']
    #allocation7 [shape = 'u8[65536]{0}', space=vmem, size = 0x10000, scoped, tag = 'input window, operand 2, single buffered']
    #allocation8 [shape = 'u8[65536]{0}', space=vmem, size = 0x10000, scoped, tag = 'input window, operand 3, single buffered']
    #allocation9 [shape = 's32[1]{0}', space=sflag, size = 0x4, scoped, tag = 'scoped memory for tpu_custom_call.1']
    #allocation10 [shape = 'u8[4096]{0}', space=vmem, size = 0x1000, scoped, tag = 'output window, operand 0, single buffered']
    %9 = vsyncpa [#allocation3], 0
    %10 = vsyncpa [#allocation6], 0
    %11 = vsyncpa [#allocation9], 0
    %12 = vsyncpa [#allocation4], 0
    // Predicated region
    $region2: #{tpu_custom_call.1} parent=1 // pred_check
      _
    $region3: #{tpu_custom_call.1} parent=1 // pred_check_branch
      %14 = sbr.rel (0) target = $region5
    $region4: #{tpu_custom_call.1} parent=1 // pred_region
      %s16 = ssub.s32 128, 128
      %17 = vsyncadd [#allocation3], %s16
      %s19 = sshll.u32 [#allocation2], 4
      %s20 = int_to_ptr.vmem [resolvable:$true] %s19
      %22 = dma.hbm_to_vmem [thread:$0]  %s0, 128, %s20, [#allocation3]
    $region5: #{tpu_custom_call.1} parent=1 // pred_fallthru
      _
    // Predicated region
    $region6: #{tpu_custom_call.1} parent=1 // pred_check
      _
    $region7: #{tpu_custom_call.1} parent=1 // pred_check_branch
      %24 = sbr.rel (0) target = $region9
    $region8: #{tpu_custom_call.1} parent=1 // pred_region
      %s26 = ssub.s32 4096, 4096
      %27 = vsyncadd [#allocation6], %s26
      %s28 = sshll.u32 [#allocation5], 4
      %s29 = int_to_ptr.vmem [resolvable:$true] %s28
      %34 = dma.hbm_to_vmem [thread:$0]  %s1, 4096, %s29, [#allocation6], 256, 256, 16
    $region9: #{tpu_custom_call.1} parent=1 // pred_fallthru
      _
    // Predicated region
    $region10: #{tpu_custom_call.1} parent=1 // pred_check
      _
    $region11: #{tpu_custom_call.1} parent=1 // pred_check_branch
      %36 = sbr.rel (0) target = $region13
    $region12: #{tpu_custom_call.1} parent=1 // pred_region
      %s38 = ssub.s32 2048, 2048
      %39 = vsyncadd [#allocation6], %s38
      %s40 = sshll.u32 [#allocation7], 4
      %s41 = int_to_ptr.vmem [resolvable:$true] %s40
      %46 = dma.hbm_to_vmem [thread:$0]  %s2, 2048, %s41, [#allocation6], 128, 128, 8
    $region13: #{tpu_custom_call.1} parent=1 // pred_fallthru
      _
    // Predicated region
    $region14: #{tpu_custom_call.1} parent=1 // pred_check
      _
    $region15: #{tpu_custom_call.1} parent=1 // pred_check_branch
      %48 = sbr.rel (0) target = $region17
    $region16: #{tpu_custom_call.1} parent=1 // pred_region
      %s50 = ssub.s32 2048, 2048
      %51 = vsyncadd [#allocation9], %s50
      %s52 = sshll.u32 [#allocation8], 4
      %s53 = int_to_ptr.vmem [resolvable:$true] %s52
      %58 = dma.hbm_to_vmem [thread:$0]  %s3, 2048, %s53, [#allocation9], 128, 128, 8
    $region17: #{tpu_custom_call.1} parent=1 // pred_fallthru
      _
    // Predicated region
    $region18: #{tpu_custom_call.1} parent=1 // pred_check
      _
    $region19: #{tpu_custom_call.1} parent=1 // pred_check_branch
      %60 = sbr.rel (0) target = $region21
    $region20: #{tpu_custom_call.1} parent=1 // pred_region
      %61 = dma.done [#allocation3], 128
    $region21: #{tpu_custom_call.1} parent=1 // pred_fallthru
      _
    // Predicated region
    $region22: #{tpu_custom_call.1} parent=1 // pred_check
      _
    $region23: #{tpu_custom_call.1} parent=1 // pred_check_branch
      %63 = sbr.rel (0) target = $region25
    $region24: #{tpu_custom_call.1} parent=1 // pred_region
      %64 = dma.done [#allocation6], 4096
    $region25: #{tpu_custom_call.1} parent=1 // pred_fallthru
      _
    // Predicated region
    $region26: #{tpu_custom_call.1} parent=1 // pred_check
      _
    $region27: #{tpu_custom_call.1} parent=1 // pred_check_branch
      %66 = sbr.rel (0) target = $region29
    $region28: #{tpu_custom_call.1} parent=1 // pred_region
      %67 = dma.done [#allocation6], 2048
    $region29: #{tpu_custom_call.1} parent=1 // pred_fallthru
      _
    // Predicated region
    $region30: #{tpu_custom_call.1} parent=1 // pred_check
      _
    $region31: #{tpu_custom_call.1} parent=1 // pred_check_branch
      %69 = sbr.rel (0) target = $region33
    $region32: #{tpu_custom_call.1} parent=1 // pred_region
      %70 = dma.done [#allocation9], 2048
    $region33: #{tpu_custom_call.1} parent=1 // pred_fallthru
      _
    %v71 = vld [vmem:[#allocation2] sm:$0xff]
    %v72 = vld [vmem:[#allocation5] sm:$0xff]
    %v73 = vld [vmem:[#allocation5 + $0x8] sm:$0xff]
    %v74 = vld [vmem:[#allocation5 + $0x10] sm:$0xff]
    %v75 = vld [vmem:[#allocation5 + $0x18] sm:$0xff]
    %v76 = vld [vmem:[#allocation5 + $0x20] sm:$0xff]
    %v77 = vld [vmem:[#allocation5 + $0x28] sm:$0xff]
    %v78 = vld [vmem:[#allocation5 + $0x30] sm:$0xff]
    %v79 = vld [vmem:[#allocation5 + $0x38] sm:$0xff]
    %v80 = vld [vmem:[#allocation5 + $0x40] sm:$0xff]
    %v81 = vld [vmem:[#allocation5 + $0x48] sm:$0xff]
    %v82 = vld [vmem:[#allocation5 + $0x50] sm:$0xff]
    %v83 = vld [vmem:[#allocation5 + $0x58] sm:$0xff]
    %v84 = vld [vmem:[#allocation5 + $0x60] sm:$0xff]
    %v85 = vld [vmem:[#allocation5 + $0x68] sm:$0xff]
    %v86 = vld [vmem:[#allocation5 + $0x70] sm:$0xff]
    %v87 = vld [vmem:[#allocation5 + $0x78] sm:$0xff]
    %v88 = vld [vmem:[#allocation5 + $0x80] sm:$0xff]
    %v89 = vld [vmem:[#allocation5 + $0x88] sm:$0xff]
    %v90 = vld [vmem:[#allocation5 + $0x90] sm:$0xff]
    %v91 = vld [vmem:[#allocation5 + $0x98] sm:$0xff]
    %v92 = vld [vmem:[#allocation5 + $0xa0] sm:$0xff]
    %v93 = vld [vmem:[#allocation5 + $0xa8] sm:$0xff]
    %v94 = vld [vmem:[#allocation5 + $0xb0] sm:$0xff]
    %v95 = vld [vmem:[#allocation5 + $0xb8] sm:$0xff]
    %v96 = vld [vmem:[#allocation5 + $0xc0] sm:$0xff]
    %v97 = vld [vmem:[#allocation5 + $0xc8] sm:$0xff]
    %v98 = vld [vmem:[#allocation5 + $0xd0] sm:$0xff]
    %v99 = vld [vmem:[#allocation5 + $0xd8] sm:$0xff]
    %v100 = vld [vmem:[#allocation5 + $0xe0] sm:$0xff]
    %v101 = vld [vmem:[#allocation5 + $0xe8] sm:$0xff]
    %v102 = vld [vmem:[#allocation5 + $0xf0] sm:$0xff]
    %v103 = vld [vmem:[#allocation5 + $0xf8] sm:$0xff]
    %104 = vmatprep.subr.mxu0 %v73
    %105 = vmatpush1.msra.mxu0 %v72
    %106 = vmatprep.subr.mxu0 %v75
    %107 = vmatpush1.msra.mxu0 %v74
    %108 = vmatprep.subr.mxu0 %v77
    %109 = vmatpush1.msra.mxu0 %v76
    %110 = vmatprep.subr.mxu0 %v79
    %111 = vmatpush1.msra.mxu0 %v78
    %112 = vmatprep.subr.mxu0 %v81
    %113 = vmatpush1.msra.mxu0 %v80
    %114 = vmatprep.subr.mxu0 %v83
    %115 = vmatpush1.msra.mxu0 %v82
    %116 = vmatprep.subr.mxu0 %v85
    %117 = vmatpush1.msra.mxu0 %v84
    %118 = vmatprep.subr.mxu0 %v87
    %119 = vmatpush1.msra.mxu0 %v86
    %120 = vmatprep.subr.mxu0 %v89
    %121 = vmatpush1.msra.mxu0 %v88
    %122 = vmatprep.subr.mxu0 %v91
    %123 = vmatpush1.msra.mxu0 %v90
    %124 = vmatprep.subr.mxu0 %v93
    %125 = vmatpush1.msra.mxu0 %v92
    %126 = vmatprep.subr.mxu0 %v95
    %127 = vmatpush1.msra.mxu0 %v94
    %128 = vmatprep.subr.mxu0 %v97
    %129 = vmatpush1.msra.mxu0 %v96
    %130 = vmatprep.subr.mxu0 %v99
    %131 = vmatpush1.msra.mxu0 %v98
    %132 = vmatprep.subr.mxu0 %v101
    %133 = vmatpush1.msra.mxu0 %v100
    %134 = vmatprep.subr.mxu0 %v103
    %135 = vmatpush1.msra.mxu0 %v102
    %136 = vmatprep.subr.mxu0 0.0
    %137 = vmatpush1.msra.mxu0 0.0
    %138 = vmatprep.subr.mxu0 0.0
    %139 = vmatpush1.msra.mxu0 0.0
    %140 = vmatprep.subr.mxu0 0.0
    %141 = vmatpush1.msra.mxu0 0.0
    %142 = vmatprep.subr.mxu0 0.0
    %143 = vmatpush1.msra.mxu0 0.0
    %144 = vmatprep.subr.mxu0 0.0
    %145 = vmatpush1.msra.mxu0 0.0
    %146 = vmatprep.subr.mxu0 0.0
    %147 = vmatpush1.msra.mxu0 0.0
    %148 = vmatprep.subr.mxu0 0.0
    %149 = vmatpush1.msra.mxu0 0.0
    %150 = vmatprep.subr.mxu0 0.0
    %151 = vmatpush1.msra.mxu0 0.0
    %152 = vmatprep.subr.mxu0 0.0
    %153 = vmatpush1.msra.mxu0 0.0
    %154 = vmatprep.subr.mxu0 0.0
    %155 = vmatpush1.msra.mxu0 0.0
    %156 = vmatprep.subr.mxu0 0.0
    %157 = vmatpush1.msra.mxu0 0.0
    %158 = vmatprep.subr.mxu0 0.0
    %159 = vmatpush1.msra.mxu0 0.0
    %160 = vmatprep.subr.mxu0 0.0
    %161 = vmatpush1.msra.mxu0 0.0
    %162 = vmatprep.subr.mxu0 0.0
    %163 = vmatpush1.msra.mxu0 0.0
    %164 = vmatprep.subr.mxu0 0.0
    %165 = vmatpush1.msra.mxu0 0.0
    %166 = vmatprep.subr.mxu0 0.0
    %167 = vmatpush1.msra.mxu0 0.0
    %168 = vmatprep.mubr.f32.mxu0 0.0
    %169 = vmatmul.mubr.f32.gmra.mrb[0].mxu0 %v71
    %v170 = vpop.f32.mrb[0].mxu0
    %v171 = vadd.f32 0.0, %v170
    %v172 = vpop.f32.mrb[0].mxu0
    %v173 = vadd.f32 0.0, %v172
    %174 = vdwg.mxu0
    %v175 = vmul.f32 %v171, %v171
    %v176 = vmul.f32 %v173, %v173
    %v177 = vadd.f32 %v175, %v176
    %v178 = vld [vmem:[#allocation7] sm:$0xff]
    %v179 = vld [vmem:[#allocation7 + $0x8] sm:$0xff]
    %v180 = vld [vmem:[#allocation7 + $0x10] sm:$0xff]
    %v181 = vld [vmem:[#allocation7 + $0x18] sm:$0xff]
    %v182 = vld [vmem:[#allocation7 + $0x20] sm:$0xff]
    %v183 = vld [vmem:[#allocation7 + $0x28] sm:$0xff]
    %v184 = vld [vmem:[#allocation7 + $0x30] sm:$0xff]
    %v185 = vld [vmem:[#allocation7 + $0x38] sm:$0xff]
    %v186 = vld [vmem:[#allocation7 + $0x40] sm:$0xff]
    %v187 = vld [vmem:[#allocation7 + $0x48] sm:$0xff]
    %v188 = vld [vmem:[#allocation7 + $0x50] sm:$0xff]
    %v189 = vld [vmem:[#allocation7 + $0x58] sm:$0xff]
    %v190 = vld [vmem:[#allocation7 + $0x60] sm:$0xff]
    %v191 = vld [vmem:[#allocation7 + $0x68] sm:$0xff]
    %v192 = vld [vmem:[#allocation7 + $0x70] sm:$0xff]
    %v193 = vld [vmem:[#allocation7 + $0x78] sm:$0xff]
    %194 = vmatprep.subr.mxu0 0.0
    %195 = vmatpush1.msra.mxu0 %v178
    %196 = vmatprep.subr.mxu0 0.0
    %197 = vmatpush1.msra.mxu0 %v179
    %198 = vmatprep.subr.mxu0 0.0
    %199 = vmatpush1.msra.mxu0 %v180
    %200 = vmatprep.subr.mxu0 0.0
    %201 = vmatpush1.msra.mxu0 %v181
    %202 = vmatprep.subr.mxu0 0.0
    %203 = vmatpush1.msra.mxu0 %v182
    %204 = vmatprep.subr.mxu0 0.0
    %205 = vmatpush1.msra.mxu0 %v183
    %206 = vmatprep.subr.mxu0 0.0
    %207 = vmatpush1.msra.mxu0 %v184
    %208 = vmatprep.subr.mxu0 0.0
    %209 = vmatpush1.msra.mxu0 %v185
    %210 = vmatprep.subr.mxu0 0.0
    %211 = vmatpush1.msra.mxu0 %v186
    %212 = vmatprep.subr.mxu0 0.0
    %213 = vmatpush1.msra.mxu0 %v187
    %214 = vmatprep.subr.mxu0 0.0
    %215 = vmatpush1.msra.mxu0 %v188
    %216 = vmatprep.subr.mxu0 0.0
    %217 = vmatpush1.msra.mxu0 %v189
    %218 = vmatprep.subr.mxu0 0.0
    %219 = vmatpush1.msra.mxu0 %v190
    %220 = vmatprep.subr.mxu0 0.0
    %221 = vmatpush1.msra.mxu0 %v191
    %222 = vmatprep.subr.mxu0 0.0
    %223 = vmatpush1.msra.mxu0 %v192
    %224 = vmatprep.subr.mxu0 0.0
    %225 = vmatpush1.msra.mxu0 %v193
    %226 = vmatprep.subr.mxu0 0.0
    %227 = vmatpush1.msra.mxu0 0.0
    %228 = vmatprep.subr.mxu0 0.0
    %229 = vmatpush1.msra.mxu0 0.0
    %230 = vmatprep.subr.mxu0 0.0
    %231 = vmatpush1.msra.mxu0 0.0
    %232 = vmatprep.subr.mxu0 0.0
    %233 = vmatpush1.msra.mxu0 0.0
    %234 = vmatprep.subr.mxu0 0.0
    %235 = vmatpush1.msra.mxu0 0.0
    %236 = vmatprep.subr.mxu0 0.0
    %237 = vmatpush1.msra.mxu0 0.0
    %238 = vmatprep.subr.mxu0 0.0
    %239 = vmatpush1.msra.mxu0 0.0
    %240 = vmatprep.subr.mxu0 0.0
    %241 = vmatpush1.msra.mxu0 0.0
    %242 = vmatprep.subr.mxu0 0.0
    %243 = vmatpush1.msra.mxu0 0.0
    %244 = vmatprep.subr.mxu0 0.0
    %245 = vmatpush1.msra.mxu0 0.0
    %246 = vmatprep.subr.mxu0 0.0
    %247 = vmatpush1.msra.mxu0 0.0
    %248 = vmatprep.subr.mxu0 0.0
    %249 = vmatpush1.msra.mxu0 0.0
    %250 = vmatprep.subr.mxu0 0.0
    %251 = vmatpush1.msra.mxu0 0.0
    %252 = vmatprep.subr.mxu0 0.0
    %253 = vmatpush1.msra.mxu0 0.0
    %254 = vmatprep.subr.mxu0 0.0
    %255 = vmatpush1.msra.mxu0 0.0
    %256 = vmatprep.subr.mxu0 0.0
    %257 = vmatpush1.msra.mxu0 0.0
    %258 = vmatprep.mubr.f32.mxu0 0.0
    %259 = vmatmul.mubr.f32.gmra.mrb[0].mxu0 %v177
    %v260 = vpop.f32.mrb[0].mxu0
    %v261 = vadd.f32 0.0, %v260
    %v262 = vpop.f32.mrb[0].mxu0
    %263 = vdwg.mxu0
    %v264 = vmax.f32 %v261, 1.1920929e-07
    %v265 = vlog2.pop %v264
    %v266 = vmul.f32 %v265, 0.6931472
    %v267 = vld [vmem:[#allocation8] sm:$0xff]
    %v268 = vld [vmem:[#allocation8 + $0x8] sm:$0xff]
    %v269 = vld [vmem:[#allocation8 + $0x10] sm:$0xff]
    %v270 = vld [vmem:[#allocation8 + $0x18] sm:$0xff]
    %v271 = vld [vmem:[#allocation8 + $0x20] sm:$0xff]
    %v272 = vld [vmem:[#allocation8 + $0x28] sm:$0xff]
    %v273 = vld [vmem:[#allocation8 + $0x30] sm:$0xff]
    %v274 = vld [vmem:[#allocation8 + $0x38] sm:$0xff]
    %v275 = vld [vmem:[#allocation8 + $0x40] sm:$0xff]
    %v276 = vld [vmem:[#allocation8 + $0x48] sm:$0xff]
    %v277 = vld [vmem:[#allocation8 + $0x50] sm:$0xff]
    %v278 = vld [vmem:[#allocation8 + $0x58] sm:$0xff]
    %v279 = vld [vmem:[#allocation8 + $0x60] sm:$0xff]
    %v280 = vld [vmem:[#allocation8 + $0x68] sm:$0xff]
    %v281 = vld [vmem:[#allocation8 + $0x70] sm:$0xff]
    %v282 = vld [vmem:[#allocation8 + $0x78] sm:$0xff]
    %283 = vmatprep.subr.mxu0 0.0
    %284 = vmatpush1.msra.mxu0 %v267
    %285 = vmatprep.subr.mxu0 0.0
    %286 = vmatpush1.msra.mxu0 %v268
    %287 = vmatprep.subr.mxu0 0.0
    %288 = vmatpush1.msra.mxu0 %v269
    %289 = vmatprep.subr.mxu0 0.0
    %290 = vmatpush1.msra.mxu0 %v270
    %291 = vmatprep.subr.mxu0 0.0
    %292 = vmatpush1.msra.mxu0 %v271
    %293 = vmatprep.subr.mxu0 0.0
    %294 = vmatpush1.msra.mxu0 %v272
    %295 = vmatprep.subr.mxu0 0.0
    %296 = vmatpush1.msra.mxu0 %v273
    %297 = vmatprep.subr.mxu0 0.0
    %298 = vmatpush1.msra.mxu0 %v274
    %299 = vmatprep.subr.mxu0 0.0
    %300 = vmatpush1.msra.mxu0 %v275
    %301 = vmatprep.subr.mxu0 0.0
    %302 = vmatpush1.msra.mxu0 %v276
    %303 = vmatprep.subr.mxu0 0.0
    %304 = vmatpush1.msra.mxu0 %v277
    %305 = vmatprep.subr.mxu0 0.0
    %306 = vmatpush1.msra.mxu0 %v278
    %307 = vmatprep.subr.mxu0 0.0
    %308 = vmatpush1.msra.mxu0 %v279
    %309 = vmatprep.subr.mxu0 0.0
    %310 = vmatpush1.msra.mxu0 %v280
    %311 = vmatprep.subr.mxu0 0.0
    %312 = vmatpush1.msra.mxu0 %v281
    %313 = vmatprep.subr.mxu0 0.0
    %314 = vmatpush1.msra.mxu0 %v282
    %315 = vmatprep.subr.mxu0 0.0
    %316 = vmatpush1.msra.mxu0 0.0
    %317 = vmatprep.subr.mxu0 0.0
    %318 = vmatpush1.msra.mxu0 0.0
    %319 = vmatprep.subr.mxu0 0.0
    %320 = vmatpush1.msra.mxu0 0.0
    %321 = vmatprep.subr.mxu0 0.0
    %322 = vmatpush1.msra.mxu0 0.0
    %323 = vmatprep.subr.mxu0 0.0
    %324 = vmatpush1.msra.mxu0 0.0
    %325 = vmatprep.subr.mxu0 0.0
    %326 = vmatpush1.msra.mxu0 0.0
    %327 = vmatprep.subr.mxu0 0.0
    %328 = vmatpush1.msra.mxu0 0.0
    %329 = vmatprep.subr.mxu0 0.0
    %330 = vmatpush1.msra.mxu0 0.0
    %331 = vmatprep.subr.mxu0 0.0
    %332 = vmatpush1.msra.mxu0 0.0
    %333 = vmatprep.subr.mxu0 0.0
    %334 = vmatpush1.msra.mxu0 0.0
    %335 = vmatprep.subr.mxu0 0.0
    %336 = vmatpush1.msra.mxu0 0.0
    %337 = vmatprep.subr.mxu0 0.0
    %338 = vmatpush1.msra.mxu0 0.0
    %339 = vmatprep.subr.mxu0 0.0
    %340 = vmatpush1.msra.mxu0 0.0
    %341 = vmatprep.subr.mxu0 0.0
    %342 = vmatpush1.msra.mxu0 0.0
    %343 = vmatprep.subr.mxu0 0.0
    %344 = vmatpush1.msra.mxu0 0.0
    %345 = vmatprep.subr.mxu0 0.0
    %346 = vmatpush1.msra.mxu0 0.0
    %347 = vmatprep.mubr.f32.mxu0 0.0
    %348 = vmatmul.mubr.f32.gmra.mrb[0].mxu0 %v266
    %v349 = vpop.f32.mrb[0].mxu0
    %v350 = vadd.f32 0.0, %v349
    %v351 = vpop.f32.mrb[0].mxu0
    %352 = vdwg.mxu0
    %353 = vst [vmem:[#allocation10] sm:$0xff] %v350
    // Predicated region
    $region34: #{tpu_custom_call.1} parent=1 // pred_check
      _
    $region35: #{tpu_custom_call.1} parent=1 // pred_check_branch
      %355 = sbr.rel (0) target = $region37
    $region36: #{tpu_custom_call.1} parent=1 // pred_region
      %s357 = ssub.s32 128, 128
      %358 = vsyncadd [#allocation4], %s357
      %s360 = sshll.u32 [#allocation10], 4
      %s361 = int_to_ptr.vmem [resolvable:$true] %s360
      %363 = dma.vmem_to_hbm [thread:$0]  %s361, 128, %s4, [#allocation4]
    $region37: #{tpu_custom_call.1} parent=1 // pred_fallthru
      _
    // Predicated region
    $region38: #{tpu_custom_call.1} parent=1 // pred_check
      _
    $region39: #{tpu_custom_call.1} parent=1 // pred_check_branch
      %365 = sbr.rel (0) target = $region41
    $region40: #{tpu_custom_call.1} parent=1 // pred_region
      %366 = dma.done [#allocation4], 128
    $region41: #{tpu_custom_call.1} parent=1 // pred_fallthru
      _
    %367 = vsyncpa [#allocation3], 1
    %368 = vsyncpa [#allocation6], 1
    %369 = vsyncpa [#allocation9], 1
    %370 = vsyncpa [#allocation4], 1

</llo_original>
